<compile_context>
chip_gen: v7x
topology: tpu7x:2x2x1
jax: 0.10.0
libtpu: 0.0.40
codegen_flags: <defaults>
</compile_context>

<pallas_src>
import math

import jax
import jax.numpy as jnp
from jax.experimental import pallas as pl
from jax.experimental.pallas import tpu as pltpu


# -----------------------------------------------------------------------------
# hardware-aware budgeting helpers
# -----------------------------------------------------------------------------
def _vmem_capacity_bytes():
    """Physical VMEM per TensorCore; conservative (v7x-sized) fallback."""
    try:
        cap = int(getattr(pltpu.get_tpu_info(), "vmem_capacity_bytes", 0))
        if cap > 0:
            return cap
    except Exception:
        pass
    return 64 << 20


def _divisor_tiles(dim, align):
    """Divisors of `dim` that are multiples of `align`, descending; else [dim]."""
    if dim % align == 0:
        cands = [t for t in range(dim, 0, -align) if dim % t == 0]
        if cands:
            return cands
    return [dim]


def _choose_pool_tiles(B, S, H, itemsize, budget, want_h_split):
    """Pick (ts, th) so double-buffered blocks fit the per-generation VMEM budget."""
    th_cands = _divisor_tiles(H, 128)
    if want_h_split:  # v7x: make the parallel H-tile axis >= 2 so both TCs stream
        split = [t for t in th_cands if H // t >= 2]
        if split:
            th_cands = split
    ts_cands = _divisor_tiles(S, 128)

    def need(ts, th):
        h_blk = B * ts * th * itemsize
        m_blk = B * ts * itemsize
        o_blk = B * th * 4
        scratch = B * th * 4 + 8 * 128 * 4
        return 2 * (h_blk + m_blk + o_blk) + scratch

    for th in th_cands:          # prefer widest (most contiguous) hidden tile
        for ts in ts_cands:      # then the longest sequence chunk that fits
            if need(ts, th) + (8 << 20) <= budget:
                return ts, th, need(ts, th)
    ts, th = ts_cands[-1], th_cands[-1]
    return ts, th, need(ts, th)


def _choose_head_tile(B, H, w_itemsize, budget):
    """Largest N-tile of W1 that fits, preferring >= 2 tiles (pipelining + v7x split)."""
    tn_cands = _divisor_tiles(H, 128)
    if H % 128 == 0:
        split = [t for t in tn_cands if (H // t) >= 2 and (H // t) % 2 == 0]
        if split:
            tn_cands = split

    def need(tn):
        return 2 * (B * H * 4 + H * tn * w_itemsize + tn * 4 + tn * w_itemsize
                    + B * 4) + 8 * 128 * 4

    for tn in tn_cands:
        if need(tn) + (8 << 20) <= budget:
            return tn, need(tn)
    tn = tn_cands[-1]
    return tn, need(tn)


def _vmem_limit(need, budget):
    return int(min(max(need + (8 << 20), 32 << 20), budget))


# -----------------------------------------------------------------------------
# Kernel 1: masked mean pooling over the sequence (pooling_method='mean')
# -----------------------------------------------------------------------------
def _masked_mean_pool_kernel(nvalid_ref, h_ref, mask_ref, pooled_ref,
                             sum_acc, cnt_acc):
    s = pl.program_id(1)

    @pl.when(s == 0)
    def _init():
        sum_acc[...] = jnp.zeros_like(sum_acc)
        cnt_acc[...] = jnp.zeros_like(cnt_acc)

    @pl.when(s < nvalid_ref[0])            # skip fully-padded sequence chunks
    def _accumulate():
        h = h_ref[...]                      # (B, TS, TH) bf16
        m = mask_ref[...]                   # (B, TS)     bf16
        # mask-weighted sum over this chunk as an MXU contraction, f32 accum
        part = jnp.einsum('bqs,bsh->bqh', m[:, None, :], h,
                          preferred_element_type=jnp.float32)   # (B, 1, TH)
        sum_acc[...] += part[:, 0, :]
        cnt_acc[...] += jnp.sum(m.astype(jnp.float32), axis=1, keepdims=True)

    @pl.when(s == pl.num_programs(1) - 1)
    def _finalize():
        denom = jnp.maximum(cnt_acc[...], jnp.float32(1e-9))    # clamp(min=1e-9)
        pooled_ref[...] = (sum_acc[...] / denom).astype(pooled_ref.dtype)


def masked_mean_pool(hidden_states, attention_mask, *, seq_tile=None, h_tile=None,
                     stream_dtype=jnp.bfloat16):
    B, S, H = hidden_states.shape
    cap = _vmem_capacity_bytes()
    budget = (cap * 3) // 4                 # ~48 MiB on v7x, ~96 MiB on v5e/v6e
    small_vmem = cap < (100 << 20)          # treat as v7x (2 TCs, 64 MiB/TC)
    isz = jnp.dtype(stream_dtype).itemsize

    ts, th = seq_tile, h_tile
    if ts is None or th is None:
        ts_auto, th_auto, _ = _choose_pool_tiles(B, S, H, isz, budget,
                                                 want_h_split=small_vmem)
        ts = ts if ts is not None else ts_auto
        th = th if th is not None else th_auto
    assert S % ts == 0 and H % th == 0
    ns, nh = S // ts, H // th

    hs = hidden_states.astype(stream_dtype)          # stream big tensor in bf16
    mask = attention_mask.astype(stream_dtype)       # 0/1 exact in bf16

    # Last chunk (along S) containing any valid token — uses the max valid
    # POSITION (+1), so left-padded / non-contiguous masks are handled.
    valid = attention_mask > 0
    last_pos = jnp.max(
        jnp.where(valid, jnp.arange(S, dtype=jnp.int32)[None, :] + 1, 0))
    n_valid = jnp.clip((last_pos + ts - 1) // ts, 1, ns).astype(jnp.int32).reshape(1)

    def h_map(hi, si, nv):
        # clamp so fully-padded chunks re-use the resident block (DMA elided)
        return (0, jnp.minimum(si, nv[0] - 1), hi)

    def m_map(hi, si, nv):
        return (0, jnp.minimum(si, nv[0] - 1))

    need = 2 * (B * ts * th * isz + B * ts * isz + B * th * 4) + (B * th * 4 + 4096)

    grid_spec = pltpu.PrefetchScalarGridSpec(
        num_scalar_prefetch=1,
        grid=(nh, ns),
        in_specs=[
            pl.BlockSpec((B, ts, th), h_map),
            pl.BlockSpec((B, ts), m_map),
        ],
        out_specs=pl.BlockSpec((B, th), lambda hi, si, nv: (0, hi)),
        scratch_shapes=[
            pltpu.VMEM((B, th), jnp.float32),   # f32 sum accumulator
            pltpu.VMEM((B, 1), jnp.float32),    # f32 token-count accumulator
        ],
    )
    return pl.pallas_call(
        _masked_mean_pool_kernel,
        out_shape=jax.ShapeDtypeStruct((B, H), jnp.float32),
        grid_spec=grid_spec,
        compiler_params=pltpu.CompilerParams(
            dimension_semantics=("parallel", "arbitrary"),
            vmem_limit_bytes=_vmem_limit(need, budget),
        ),
    )(n_valid, hs, mask)


# -----------------------------------------------------------------------------
# Kernel 2: score head  Linear(H,H) -> GELU(exact) -> Linear(H,1)
# W1 / w2-row streamed in bf16, N-tiled over output columns; the N-tiles are
# optionally split 2-way on a leading parallel axis (both v7x TensorCores).
# -----------------------------------------------------------------------------
def _score_head_kernel(pooled_ref, w1_ref, b1_ref, w2_ref, out_ref):
    n = pl.program_id(1)

    @pl.when(n == 0)
    def _init():
        out_ref[...] = jnp.zeros_like(out_ref)

    x = pooled_ref[...].astype(w1_ref.dtype)                          # (B, H)
    h1 = jnp.dot(x, w1_ref[...],
                 preferred_element_type=jnp.float32) + b1_ref[...]    # (B, TN) f32
    # exact (erf-based) GELU, matching nn.GELU()
    g = 0.5 * h1 * (1.0 + jax.lax.erf(h1 * jnp.float32(1.0 / math.sqrt(2.0))))
    w2 = w2_ref[...].astype(jnp.float32)                              # (1, TN)
    out_ref[...] += jnp.sum(g * w2, axis=-1, keepdims=True)           # (B, 1) partial


def score_head(pooled, w1, b1, w2, b2, *, n_tile=None,
               weight_stream_dtype=jnp.bfloat16):
    B, H = pooled.shape
    cap = _vmem_capacity_bytes()
    budget = (cap * 3) // 4
    w_isz = jnp.dtype(weight_stream_dtype).itemsize

    if n_tile is None:
        tn, need = _choose_head_tile(B, H, w_isz, budget)
    else:
        tn = n_tile
        need = 2 * (B * H * 4 + H * tn * w_isz + tn * 4 + tn * w_isz + B * 4)
    assert H % tn == 0
    n_tiles = H // tn
    n_splits = 2 if (n_tiles >= 2 and n_tiles % 2 == 0) else 1
    npc = n_tiles // n_splits

    pooled32 = pooled.astype(jnp.float32)
    w1s = w1.astype(weight_stream_dtype)
    b1_2d = b1.reshape(1, H).astype(jnp.float32)
    w2_row = w2.reshape(1, H).astype(weight_stream_dtype)   # lane-dense row vector

    partials = pl.pallas_call(
        _score_head_kernel,
        out_shape=jax.ShapeDtypeStruct((n_splits, B, 1), jnp.float32),
        grid=(n_splits, npc),
        in_specs=[
            pl.BlockSpec((B, H), lambda c, n: (0, 0)),
            pl.BlockSpec((H, tn), lambda c, n: (0, c * npc + n)),
            pl.BlockSpec((1, tn), lambda c, n: (0, c * npc + n)),
            pl.BlockSpec((1, tn), lambda c, n: (0, c * npc + n)),
        ],
        out_specs=pl.BlockSpec((None, B, 1), lambda c, n: (c, 0, 0)),
        compiler_params=pltpu.CompilerParams(
            dimension_semantics=("parallel", "arbitrary"),
            vmem_limit_bytes=_vmem_limit(need, budget),
        ),
    )(pooled32, w1s, b1_2d, w2_row)

    # tiny finalize in JAX: sum the per-core partials and add the final bias
    return partials.sum(axis=0) + b2.reshape(1, 1).astype(jnp.float32)


# -----------------------------------------------------------------------------
# public wrapper
# -----------------------------------------------------------------------------
def reward_head(hidden_states, attention_mask, w1, b1, w2, b2,
                *, seq_tile=None, h_tile=None, n_tile=None):
    """hidden_states (B,S,H), attention_mask (B,S) -> scores (B,1) f32."""
    pooled = masked_mean_pool(hidden_states, attention_mask,
                              seq_tile=seq_tile, h_tile=h_tile)
    return score_head(pooled, w1, b1, w2, b2, n_tile=n_tile)


def init_score_head_params(key, hidden_size):
    """Deterministic init matching the module: N(0, 0.02) weights, 0.1 biases."""
    k1, k2 = jax.random.split(key)
    w1 = (0.02 * jax.random.normal(k1, (hidden_size, hidden_size))).astype(jnp.float32)
    b1 = jnp.full((hidden_size,), 0.1, dtype=jnp.float32)
    w2 = (0.02 * jax.random.normal(k2, (hidden_size, 1))).astype(jnp.float32)
    b2 = jnp.full((1,), 0.1, dtype=jnp.float32)
    return w1, b1, w2, b2


if __name__ == "__main__":
    B, S, H = 2, 512, 32

    key = jax.random.PRNGKey(0)
    k_h, k_p = jax.random.split(key)

    # Synthetic bf16 "last hidden states" from the (untranslated) frozen backbone.
    hidden_states = jax.random.normal(k_h, (B, S, H), dtype=jnp.float32).astype(jnp.bfloat16)

    # One right-padded and one left-padded sequence: exercises both the
    # padded-chunk skip and the max-position n_valid fix.
    pos = jnp.arange(S)
    mask0 = pos < 300                       # valid tokens at positions [0, 300)
    mask1 = (pos >= 50) & (pos < 200)       # left-padded: valid at [50, 200)
    attention_mask = jnp.stack([mask0, mask1], axis=0).astype(jnp.float32)

    w1, b1, w2, b2 = init_score_head_params(k_p, H)

    scores = reward_head(hidden_states, attention_mask, w1, b1, w2, b2,
                         seq_tile=128)      # 4 sequence chunks, last one skipped
    scores = jax.block_until_ready(scores)

    # --- dtype-matched reference (same bf16 streaming, f32 accumulation) -----
    hs32 = hidden_states.astype(jnp.float32)
    m32 = attention_mask.astype(jnp.bfloat16).astype(jnp.float32)
    pooled_r = jnp.einsum('bsh,bs->bh', hs32, m32) / jnp.maximum(
        m32.sum(axis=1, keepdims=True), 1e-9)
    x = pooled_r.astype(jnp.bfloat16).astype(jnp.float32)
    w1b = w1.astype(jnp.bfloat16).astype(jnp.float32)
    w2b = w2.astype(jnp.bfloat16).astype(jnp.float32)
    h1 = x @ w1b + b1
    g = 0.5 * h1 * (1.0 + jax.lax.erf(h1 / jnp.sqrt(2.0)))
    ref_matched = g @ w2b + b2

    # --- full-f32 reference (exact semantics of the PyTorch module) ----------
    pooled_f32 = (hs32 * attention_mask[:, :, None]).sum(1) / jnp.maximum(
        attention_mask.sum(1, keepdims=True), 1e-9)
    h1f = pooled_f32 @ w1 + b1
    gf = 0.5 * h1f * (1.0 + jax.lax.erf(h1f / jnp.sqrt(2.0)))
    ref_f32 = gf @ w2 + b2

    assert scores.shape == (B, 1)
    assert jnp.allclose(scores, ref_matched, atol=5e-4, rtol=5e-4), (scores, ref_matched)
    assert jnp.allclose(scores, ref_f32, atol=2e-2, rtol=2e-2), (scores, ref_f32)

    print("KERNEL_OK")
</pallas_src>

<mosaic_0001>
module attributes {stable_mosaic.version = 11 : i64} {
  func.func @_masked_mean_pool_kernel(%arg0: i32, %arg1: i32, %arg2: memref<1xi32, #tpu.memory_space<smem>>, %arg3: memref<2x128x32xbf16, #tpu.memory_space<vmem>>, %arg4: memref<2x128xbf16, #tpu.memory_space<vmem>>, %arg5: memref<2x32xf32, #tpu.memory_space<vmem>>, %arg6: memref<2x32xf32, #tpu.memory_space<vmem>>, %arg7: memref<2x1xf32, #tpu.memory_space<vmem>>) attributes {dimension_semantics = [#tpu.dimension_semantics<parallel>, #tpu.dimension_semantics<arbitrary>], iteration_bounds = array<i64: 1, 4>, scalar_prefetch = 1 : i64, scratch_operands = 2 : i64, tpu.core_type = #tpu.core_type<tc>, window_params = [{transform_indices = @transform_0, window_bounds = array<i64: 2, 128, 32>}, {transform_indices = @transform_1, window_bounds = array<i64: 2, 128>}, {transform_indices = @transform_2, window_bounds = array<i64: 2, 32>}]} {
    %c0_i32 = arith.constant 0 : i32
    %0 = arith.cmpi eq, %arg1, %c0_i32 : i32
    %1 = arith.extui %0 : i1 to i32
    %c0_i32_0 = arith.constant 0 : i32
    %2 = arith.cmpi ne, %1, %c0_i32_0 : i32
    scf.if %2 {
      %cst = arith.constant 0.000000e+00 : f32
      %10 = vector.broadcast %cst : f32 to vector<2x32xf32>
      %c0_3 = arith.constant 0 : index
      %c0_4 = arith.constant 0 : index
      %11 = vector.load %arg6[%c0_3, %c0_4] : memref<2x32xf32, #tpu.memory_space<vmem>>, vector<2x32xf32>
      tpu.vector_store %arg6[%c0_3, %c0_4], %10 {strides = array<i32>} : memref<2x32xf32, #tpu.memory_space<vmem>>, vector<2x32xf32>,
      %cst_5 = arith.constant 0.000000e+00 : f32
      %12 = vector.broadcast %cst_5 : f32 to vector<2x1xf32>
      %c0_6 = arith.constant 0 : index
      %c0_7 = arith.constant 0 : index
      %13 = vector.load %arg7[%c0_6, %c0_7] : memref<2x1xf32, #tpu.memory_space<vmem>>, vector<2x1xf32>
      tpu.vector_store %arg7[%c0_6, %c0_7], %12 {strides = array<i32>} : memref<2x1xf32, #tpu.memory_space<vmem>>, vector<2x1xf32>,
    } else {
    }
    %c0 = arith.constant 0 : index
    %3 = memref.load %arg2[%c0] : memref<1xi32, #tpu.memory_space<smem>>
    %4 = arith.cmpi slt, %arg1, %3 : i32
    %5 = arith.extui %4 : i1 to i32
    %c0_i32_1 = arith.constant 0 : i32
    %6 = arith.cmpi ne, %5, %c0_i32_1 : i32
    scf.if %6 {
      %c0_3 = arith.constant 0 : index
      %c0_4 = arith.constant 0 : index
      %c0_5 = arith.constant 0 : index
      %10 = vector.load %arg3[%c0_3, %c0_4, %c0_5] : memref<2x128x32xbf16, #tpu.memory_space<vmem>>, vector<2x128x32xbf16>
      %c0_6 = arith.constant 0 : index
      %c0_7 = arith.constant 0 : index
      %11 = vector.load %arg4[%c0_6, %c0_7] : memref<2x128xbf16, #tpu.memory_space<vmem>>, vector<2x128xbf16>
      %12 = vector.shape_cast %11 : vector<2x128xbf16> to vector<2x1x128xbf16>
      "tpu.trace_start"() <{level = 10 : i32, message = "bqs,bsh->bqh"}> : () -> ()
      %cst = arith.constant dense<0.000000e+00> : vector<2x1x32xf32>
      %13 = tpu.matmul %12, %10, %cst {dimension_numbers = #tpu.dot_dimension_numbers<[2], [1], [1], [2], [0, 0, 0, 1, 1, 2], [0], [0]>} : vector<2x1x128xbf16>, vector<2x128x32xbf16>, vector<2x1x32xf32> -> vector<2x1x32xf32>
      "tpu.trace_stop"() : () -> ()
      %c0_8 = arith.constant 0 : index
      %c0_9 = arith.constant 0 : index
      %14 = vector.load %arg6[%c0_8, %c0_9] : memref<2x32xf32, #tpu.memory_space<vmem>>, vector<2x32xf32>
      %15 = vector.shape_cast %13 : vector<2x1x32xf32> to vector<2x32xf32>
      %16 = arith.addf %14, %15 : vector<2x32xf32>
      %c0_10 = arith.constant 0 : index
      %c0_11 = arith.constant 0 : index
      %17 = vector.load %arg6[%c0_10, %c0_11] : memref<2x32xf32, #tpu.memory_space<vmem>>, vector<2x32xf32>
      tpu.vector_store %arg6[%c0_10, %c0_11], %16 {strides = array<i32>} : memref<2x32xf32, #tpu.memory_space<vmem>>, vector<2x32xf32>,
      %c0_12 = arith.constant 0 : index
      %c0_13 = arith.constant 0 : index
      %18 = vector.load %arg7[%c0_12, %c0_13] : memref<2x1xf32, #tpu.memory_space<vmem>>, vector<2x1xf32>
      %19 = arith.extf %11 : vector<2x128xbf16> to vector<2x128xf32>
      %cst_14 = arith.constant dense<0.000000e+00> : vector<2xf32>
      %20 = vector.multi_reduction <add>, %19, %cst_14 [1] : vector<2x128xf32> to vector<2xf32>
      %21 = vector.shape_cast %20 : vector<2xf32> to vector<2x1xf32>
      %22 = arith.addf %18, %21 : vector<2x1xf32>
      %c0_15 = arith.constant 0 : index
      %c0_16 = arith.constant 0 : index
      %23 = vector.load %arg7[%c0_15, %c0_16] : memref<2x1xf32, #tpu.memory_space<vmem>>, vector<2x1xf32>
      tpu.vector_store %arg7[%c0_15, %c0_16], %22 {strides = array<i32>} : memref<2x1xf32, #tpu.memory_space<vmem>>, vector<2x1xf32>,
    } else {
    }
    %c3_i32 = arith.constant 3 : i32
    %7 = arith.cmpi eq, %arg1, %c3_i32 : i32
    %8 = arith.extui %7 : i1 to i32
    %c0_i32_2 = arith.constant 0 : i32
    %9 = arith.cmpi ne, %8, %c0_i32_2 : i32
    scf.if %9 {
      %c0_3 = arith.constant 0 : index
      %c0_4 = arith.constant 0 : index
      %10 = vector.load %arg7[%c0_3, %c0_4] : memref<2x1xf32, #tpu.memory_space<vmem>>, vector<2x1xf32>
      %cst = arith.constant 9.99999971E-10 : f32
      %11 = vector.broadcast %cst : f32 to vector<2x1xf32>
      %12 = arith.maximumf %10, %11 : vector<2x1xf32>
      %c0_5 = arith.constant 0 : index
      %c0_6 = arith.constant 0 : index
      %13 = vector.load %arg6[%c0_5, %c0_6] : memref<2x32xf32, #tpu.memory_space<vmem>>, vector<2x32xf32>
      %14 = vector.broadcast %12 : vector<2x1xf32> to vector<2x32xf32>
      %15 = arith.divf %13, %14 : vector<2x32xf32>
      %c0_7 = arith.constant 0 : index
      %c0_8 = arith.constant 0 : index
      %16 = vector.load %arg5[%c0_7, %c0_8] : memref<2x32xf32, #tpu.memory_space<vmem>>, vector<2x32xf32>
      tpu.vector_store %arg5[%c0_7, %c0_8], %15 {strides = array<i32>} : memref<2x32xf32, #tpu.memory_space<vmem>>, vector<2x32xf32>,
    } else {
    }
    return
  }
  func.func @transform_0(%arg0: i32, %arg1: i32, %arg2: memref<1xi32, #tpu.memory_space<smem>>) -> (i32, i32, i32) {
    %c0 = arith.constant 0 : index
    %0 = memref.load %arg2[%c0] : memref<1xi32, #tpu.memory_space<smem>>
    %c1_i32 = arith.constant 1 : i32
    %1 = arith.subi %0, %c1_i32 : i32
    %2 = arith.minsi %arg1, %1 : i32
    %c0_i32 = arith.constant 0 : i32
    %c0_i32_0 = arith.constant 0 : i32
    return %c0_i32, %2, %arg0 : i32, i32, i32
  }
  func.func @transform_1(%arg0: i32, %arg1: i32, %arg2: memref<1xi32, #tpu.memory_space<smem>>) -> (i32, i32) {
    %c0 = arith.constant 0 : index
    %0 = memref.load %arg2[%c0] : memref<1xi32, #tpu.memory_space<smem>>
    %c1_i32 = arith.constant 1 : i32
    %1 = arith.subi %0, %c1_i32 : i32
    %2 = arith.minsi %arg1, %1 : i32
    %c0_i32 = arith.constant 0 : i32
    %c0_i32_0 = arith.constant 0 : i32
    return %c0_i32, %2 : i32, i32
  }
  func.func @transform_2(%arg0: i32, %arg1: i32, %arg2: memref<1xi32, #tpu.memory_space<smem>>) -> (i32, i32) {
    %c0_i32 = arith.constant 0 : i32
    %c0_i32_0 = arith.constant 0 : i32
    return %c0_i32, %arg0 : i32, i32
  }
}

</mosaic_0001>

<llo_original>
// kernel: tpu_custom_call.1
$region0: #{tpu_custom_call.1}
  #allocation0 [shape = 'u32[]', space=smem, size = 0x4, offset = 0x4, fixed_abs, tag = 'smem constant byte address 0x4 - core index']
  #allocation1 [shape = 'u32[144,128]{1,0:T(1,128)}', space=vmem, size = 0x12000, scoped, tag = 'internal scratch']
  #allocation2 [shape = 'f32[2,32]{1,0:T(2,128)}', space=vmem, size = 0x400, scoped, tag = 'scratch operand']
  #allocation3 [shape = 'f32[2,1]{1,0:T(2,128)}', space=vmem, size = 0x400, scoped, tag = 'scratch operand']
  #allocation4 [shape = 's32[1]{0}', space=sflag, size = 0x4, scoped, tag = 'scoped memory for tpu_custom_call.1']
  #allocation5 [shape = 's32[1]{0:T(128)S(6)}', space=smem, size = 0x200, scoped, tag = 'prefetched SMEM operand 0']
  %s0 = inlined_call_operand.<no memory space> [shape: s32[1], index: 0, kind: input, shape index: {}]
  %s1 = inlined_call_operand.vmem [shape: bf16[2,512,32], index: 1, kind: input, shape index: {}]
  %s2 = inlined_call_operand.vmem [shape: bf16[2,512], index: 2, kind: input, shape index: {}]
  %s3 = inlined_call_operand.hbm [shape: f32[2,32], index: 3, kind: output, shape index: {}]
  %s4 = sld [smem:[#allocation0]]
  $region94: #{tpu_custom_call.1} parent=0
    _
  %s6 = ssub.s32 1, %s4
  %s7 = scalar_select 0, %s6, %s4
  %8 = sst [smem:[#allocation5]] %s0
  $region1: #{tpu_custom_call.1} parent=0
    #allocation6 [shape = 'u8[131072]{0}', space=vmem, size = 0x20000, scoped, tag = 'input window, operand 1']
    #allocation7 [shape = 'u8[1024]{0}', space=vmem, size = 0x400, scoped, tag = 'output window, operand 0, single buffered']
    #allocation8 [shape = 's32[2]{0}', space=sflag, size = 0x8, scoped, tag = 'scoped memory for tpu_custom_call.1']
    %9 = vsyncpa [#allocation8], 0
    loop: start=0, step=1, limit=6
    $region2: #{tpu_custom_call.1} parent=1 // loop_pre_header
      _
    $region3: #{tpu_custom_call.1} parent=1 // loop_header
      %s11 = sphi 0, %s15
      %p12 = scmp.ge.s32.totalorder %s11, 6
      %s18 = sphi 0, %s30
      %s19 = sphi 0, %s26
      %s20 = sphi 0, %s18
      %s21 = sphi 0, %s19
      %s22 = sphi 0, %s20
      %s23 = sphi 0, %s21
      %s43 = sphi 0, %s45
      %s46 = sphi 0, %s43
      %s47 = sphi 0, %s46
      %s63 = sphi 0, %s47
      %s77 = sphi 0, %s79
      %s80 = sphi 0, %s77
      %s81 = sphi 0, %s80
      %s97 = sphi 0, %s81
      %s103 = sphi 0, %s105
      %s106 = sphi 0, %s103
      %s107 = sphi 0, %s106
      %s123 = sphi 0, %s107
    $region4: #{tpu_custom_call.1} parent=1 // loop_header_branch
      %14 = sbr.rel (%p12) target = $region8
    $region5: #{tpu_custom_call.1} parent=1 // loop_body
      %s16 = ssub.s32 %s11, 1
      %s17 = ssub.s32 %s11, 2
      %s24 = sadd.s32 1, %s19
      %p25 = scmp.ge.s32.totalorder %s24, 4
      %s26 = scalar_select %p25, 0, %s24
      %s27 = sadd.s32 1, %s18
      %s28 = scalar_select %p25, %s27, %s18
      %p29 = scmp.ge.s32.totalorder %s28, 1
      %s30 = scalar_select %p29, 0, %s28
      %s31 = sld [smem:[#allocation5]]
      %s32 = ssub.s32 %s31, 1
      %p33 = scmp.lt.s32.totalorder %s19, %s32
      %s34 = scalar_select %p33, %s19, %s32
      %s35 = sld [smem:[#allocation5]]
      %s36 = ssub.s32 %s35, 1
      %p37 = scmp.lt.s32.totalorder %s26, %s36
      %s38 = scalar_select %p37, %s26, %s36
      %s39 = ssub.s32 %s34, %s38
      %s40 = ssub.s32 %s18, %s30
      %s41 = sor.u32 %s39, %s40
      %p42 = scmp.eq.s32.totalorder %s41, 0
      %s44 = sadd.s32 %s43, 1
      %s45 = scalar_select %p42, %s43, %s44
      %p48 = pneg %p42
      %p49 = scmp.eq.s32.totalorder %s11, 3
      %p50 = por %p48, %p49
      %p51 = scmp.ne.s32.totalorder %s43, %s46
      %p52 = scmp.eq.s32.totalorder %s11, 0
      %p53 = por %p51, %p52
      %p54 = scmp.ne.s32.totalorder %s43, %s46
      %p55 = scmp.eq.s32.totalorder %s16, 3
      %p56 = por %p54, %p55
      %p57 = scmp.ne.s32.totalorder %s46, %s47
      %p58 = scmp.eq.s32.totalorder %s16, 0
      %p59 = por %p57, %p58
      %p60 = scmp.ne.s32.totalorder %s46, %s47
      %p61 = scmp.eq.s32.totalorder %s17, 3
      %p62 = por %p60, %p61
      %p64 = scmp.ne.s32.totalorder %s47, %s63
      %p65 = scmp.eq.s32.totalorder %s17, 0
      %p66 = por %p64, %p65
      %s67 = sld [smem:[#allocation5]]
      %s68 = ssub.s32 %s67, 1
      %p69 = scmp.lt.s32.totalorder %s19, %s68
      %s70 = scalar_select %p69, %s19, %s68
      %s71 = sld [smem:[#allocation5]]
      %s72 = ssub.s32 %s71, 1
      %p73 = scmp.lt.s32.totalorder %s26, %s72
      %s74 = scalar_select %p73, %s26, %s72
      %s75 = ssub.s32 %s70, %s74
      %p76 = scmp.eq.s32.totalorder %s75, 0
      %s78 = sadd.s32 %s77, 1
      %s79 = scalar_select %p76, %s77, %s78
      %p82 = pneg %p76
      %p83 = scmp.eq.s32.totalorder %s11, 3
      %p84 = por %p82, %p83
      %p85 = scmp.ne.s32.totalorder %s77, %s80
      %p86 = scmp.eq.s32.totalorder %s11, 0
      %p87 = por %p85, %p86
      %p88 = scmp.ne.s32.totalorder %s77, %s80
      %p89 = scmp.eq.s32.totalorder %s16, 3
      %p90 = por %p88, %p89
      %p91 = scmp.ne.s32.totalorder %s80, %s81
      %p92 = scmp.eq.s32.totalorder %s16, 0
      %p93 = por %p91, %p92
      %p94 = scmp.ne.s32.totalorder %s80, %s81
      %p95 = scmp.eq.s32.totalorder %s17, 3
      %p96 = por %p94, %p95
      %p98 = scmp.ne.s32.totalorder %s81, %s97
      %p99 = scmp.eq.s32.totalorder %s17, 0
      %p100 = por %p98, %p99
      %s101 = ssub.s32 %s18, %s30
      %p102 = scmp.eq.s32.totalorder %s101, 0
      %s104 = sadd.s32 %s103, 1
      %s105 = scalar_select %p102, %s103, %s104
      %p108 = pneg %p102
      %p109 = scmp.eq.s32.totalorder %s11, 3
      %p110 = por %p108, %p109
      %p111 = scmp.ne.s32.totalorder %s103, %s106
      %p112 = scmp.eq.s32.totalorder %s11, 0
      %p113 = por %p111, %p112
      %p114 = scmp.ne.s32.totalorder %s103, %s106
      %p115 = scmp.eq.s32.totalorder %s16, 3
      %p116 = por %p114, %p115
      %p117 = scmp.ne.s32.totalorder %s106, %s107
      %p118 = scmp.eq.s32.totalorder %s16, 0
      %p119 = por %p117, %p118
      %p120 = scmp.ne.s32.totalorder %s106, %s107
      %p121 = scmp.eq.s32.totalorder %s17, 3
      %p122 = por %p120, %p121
      %p124 = scmp.ne.s32.totalorder %s107, %s123
      %p125 = scmp.eq.s32.totalorder %s17, 0
      %p126 = por %p124, %p125
      %p127 = scmp.le.s32.totalorder 1, %s11
      %p128 = scmp.lt.s32.totalorder %s11, 5
      %p129 = pnand %p127, %p128
      %p130 = pneg %p129
      // Predicated region
      $region9: #{tpu_custom_call.1} parent=5 // pred_check
        _
      $region10: #{tpu_custom_call.1} parent=5 // pred_check_branch
        %132 = sbr.rel (%p129) target = $region12
      $region11: #{tpu_custom_call.1} parent=5 // pred_region
        %s133 = ssub.s32 %s11, 1
      $region12: #{tpu_custom_call.1} parent=5 // pred_fallthru
        _
      %p134 = scmp.lt.s32.totalorder %s11, 4
      // Predicated region
      $region13: #{tpu_custom_call.1} parent=5 // pred_check
        %p135 = pneg %p134
      $region14: #{tpu_custom_call.1} parent=5 // pred_check_branch
        %137 = sbr.rel (%p135) target = $region16
      $region15: #{tpu_custom_call.1} parent=5 // pred_region
        // Predicated region
        $region17: #{tpu_custom_call.1} parent=15 // pred_check
          %p138 = pneg %p53
        $region18: #{tpu_custom_call.1} parent=15 // pred_check_branch
          %140 = sbr.rel (%p138) target = $region20
        $region19: #{tpu_custom_call.1} parent=15 // pred_region
          %s141 = sand.u32 %s43, 1
          %s142 = sand.u32 %s43, 1
          %s143 = smul.addr %s142, 128
          %s144 = scalar_lea.vmem [#allocation6], %s143
          %s145 = sld [smem:[#allocation5]]
          %s146 = ssub.s32 %s145, 1
          %p147 = scmp.lt.s32.totalorder %s19, %s146
          %s148 = scalar_select %p147, %s19, %s146
          %s149 = smul.u32 16, %s148
          %s150 = sadd.s32 %s18, %s149
          %s151 = smul.addr %s150, 4
          %s152 = scalar_lea.vmem %s1, %s151
          // Predicated region
          $region21: #{tpu_custom_call.1} parent=19 // pred_check
            _
          $region22: #{tpu_custom_call.1} parent=19 // pred_check_branch
            %154 = sbr.rel (0) target = $region24
          $region23: #{tpu_custom_call.1} parent=19 // pred_region
            // Predicated region
            $region25: #{tpu_custom_call.1} parent=23 // pred_check
              _
            $region26: #{tpu_custom_call.1} parent=23 // pred_check_branch
              %156 = sbr.rel target = $region28
            $region27: #{tpu_custom_call.1} parent=23 // pred_region
              // Predicated region
              $region40: #{tpu_custom_call.1} parent=27 // pred_check
                _
              $region41: #{tpu_custom_call.1} parent=27 // pred_check_branch
                %233 = sbr.rel (0) target = $region43
              $region42: #{tpu_custom_call.1} parent=27 // pred_region
                loop: start=0, step=1, limit=1
                $region44: #{tpu_custom_call.1} parent=42 // loop_pre_header
                  _
                $region45: #{tpu_custom_call.1} parent=42 // loop_header
                  %s235 = sphi 0, %s239
                  %p236 = scmp.ge.s32.totalorder %s235, 1
                  %s240 = sphi %s152, %s152
                  %s241 = sphi %s144, %s144
                $region46: #{tpu_custom_call.1} parent=42 // loop_header_branch
                  %238 = sbr.rel (%p236) target = $region50
                $region47: #{tpu_custom_call.1} parent=42 // loop_body
                  _
                $region48: #{tpu_custom_call.1} parent=42 // loop_footer
                  %s239 = sadd.s32 1, %s235
                $region49: #{tpu_custom_call.1} parent=42 // loop_footer_branch
                  %234 = sbr.rel target = $region45
                $region50: #{tpu_custom_call.1} parent=42 // loop_exit
                  _
                loop: start=0, step=1, limit=1
                $region51: #{tpu_custom_call.1} parent=42 // loop_pre_header
                  _
                $region52: #{tpu_custom_call.1} parent=42 // loop_header
                  %s244 = sphi 0, %s248
                  %p245 = scmp.ge.s32.totalorder %s244, 1
                  %s249 = sphi %s152, %s152
                  %s250 = sphi %s144, %s144
                $region53: #{tpu_custom_call.1} parent=42 // loop_header_branch
                  %247 = sbr.rel (%p245) target = $region57
                $region54: #{tpu_custom_call.1} parent=42 // loop_body
                  %v251 = vld [vmem:[%s249] sm:$0xf]
                  %252 = vst [vmem:[%s250] sm:$0xf] %v251
                  %v253 = vld [vmem:[%s249 + $0x4] sm:$0xf]
                  %254 = vst [vmem:[%s250 + $0x4] sm:$0xf] %v253
                  %v255 = vld [vmem:[%s249 + $0x8] sm:$0xf]
                  %256 = vst [vmem:[%s250 + $0x8] sm:$0xf] %v255
                  %v257 = vld [vmem:[%s249 + $0xc] sm:$0xf]
                  %258 = vst [vmem:[%s250 + $0xc] sm:$0xf] %v257
                  %v259 = vld [vmem:[%s249 + $0x10] sm:$0xf]
                  %260 = vst [vmem:[%s250 + $0x10] sm:$0xf] %v259
                  %v261 = vld [vmem:[%s249 + $0x14] sm:$0xf]
                  %262 = vst [vmem:[%s250 + $0x14] sm:$0xf] %v261
                  %v263 = vld [vmem:[%s249 + $0x18] sm:$0xf]
                  %264 = vst [vmem:[%s250 + $0x18] sm:$0xf] %v263
                  %v265 = vld [vmem:[%s249 + $0x1c] sm:$0xf]
                  %266 = vst [vmem:[%s250 + $0x1c] sm:$0xf] %v265
                  %v267 = vld [vmem:[%s249 + $0x20] sm:$0xf]
                  %268 = vst [vmem:[%s250 + $0x20] sm:$0xf] %v267
                  %v269 = vld [vmem:[%s249 + $0x24] sm:$0xf]
                  %270 = vst [vmem:[%s250 + $0x24] sm:$0xf] %v269
                  %v271 = vld [vmem:[%s249 + $0x28] sm:$0xf]
                  %272 = vst [vmem:[%s250 + $0x28] sm:$0xf] %v271
                  %v273 = vld [vmem:[%s249 + $0x2c] sm:$0xf]
                  %274 = vst [vmem:[%s250 + $0x2c] sm:$0xf] %v273
                  %v275 = vld [vmem:[%s249 + $0x30] sm:$0xf]
                  %276 = vst [vmem:[%s250 + $0x30] sm:$0xf] %v275
                  %v277 = vld [vmem:[%s249 + $0x34] sm:$0xf]
                  %278 = vst [vmem:[%s250 + $0x34] sm:$0xf] %v277
                  %v279 = vld [vmem:[%s249 + $0x38] sm:$0xf]
                  %280 = vst [vmem:[%s250 + $0x38] sm:$0xf] %v279
                  %v281 = vld [vmem:[%s249 + $0x3c] sm:$0xf]
                  %282 = vst [vmem:[%s250 + $0x3c] sm:$0xf] %v281
                  %v283 = vld [vmem:[%s249 + $0x100] sm:$0xf]
                  %284 = vst [vmem:[%s250 + $0x40] sm:$0xf] %v283
                  %v285 = vld [vmem:[%s249 + $0x104] sm:$0xf]
                  %286 = vst [vmem:[%s250 + $0x44] sm:$0xf] %v285
                  %v287 = vld [vmem:[%s249 + $0x108] sm:$0xf]
                  %288 = vst [vmem:[%s250 + $0x48] sm:$0xf] %v287
                  %v289 = vld [vmem:[%s249 + $0x10c] sm:$0xf]
                  %290 = vst [vmem:[%s250 + $0x4c] sm:$0xf] %v289
                  %v291 = vld [vmem:[%s249 + $0x110] sm:$0xf]
                  %292 = vst [vmem:[%s250 + $0x50] sm:$0xf] %v291
                  %v293 = vld [vmem:[%s249 + $0x114] sm:$0xf]
                  %294 = vst [vmem:[%s250 + $0x54] sm:$0xf] %v293
                  %v295 = vld [vmem:[%s249 + $0x118] sm:$0xf]
                  %296 = vst [vmem:[%s250 + $0x58] sm:$0xf] %v295
                  %v297 = vld [vmem:[%s249 + $0x11c] sm:$0xf]
                  %298 = vst [vmem:[%s250 + $0x5c] sm:$0xf] %v297
                  %v299 = vld [vmem:[%s249 + $0x120] sm:$0xf]
                  %300 = vst [vmem:[%s250 + $0x60] sm:$0xf] %v299
                  %v301 = vld [vmem:[%s249 + $0x124] sm:$0xf]
                  %302 = vst [vmem:[%s250 + $0x64] sm:$0xf] %v301
                  %v303 = vld [vmem:[%s249 + $0x128] sm:$0xf]
                  %304 = vst [vmem:[%s250 + $0x68] sm:$0xf] %v303
                  %v305 = vld [vmem:[%s249 + $0x12c] sm:$0xf]
                  %306 = vst [vmem:[%s250 + $0x6c] sm:$0xf] %v305
                  %v307 = vld [vmem:[%s249 + $0x130] sm:$0xf]
                  %308 = vst [vmem:[%s250 + $0x70] sm:$0xf] %v307
                  %v309 = vld [vmem:[%s249 + $0x134] sm:$0xf]
                  %310 = vst [vmem:[%s250 + $0x74] sm:$0xf] %v309
                  %v311 = vld [vmem:[%s249 + $0x138] sm:$0xf]
                  %312 = vst [vmem:[%s250 + $0x78] sm:$0xf] %v311
                  %v313 = vld [vmem:[%s249 + $0x13c] sm:$0xf]
                  %314 = vst [vmem:[%s250 + $0x7c] sm:$0xf] %v313
                $region55: #{tpu_custom_call.1} parent=42 // loop_footer
                  %s248 = sadd.s32 1, %s244
                $region56: #{tpu_custom_call.1} parent=42 // loop_footer_branch
                  %243 = sbr.rel target = $region52
                $region57: #{tpu_custom_call.1} parent=42 // loop_exit
                  _
              $region43: #{tpu_custom_call.1} parent=27 // pred_fallthru
                _
            $region28: #{tpu_custom_call.1} parent=23 // pred_fallthru
              _
            // Predicated region
            $region29: #{tpu_custom_call.1} parent=23 // pred_check
              _
            $region30: #{tpu_custom_call.1} parent=23 // pred_check_branch
              %158 = sbr.rel (0) target = $region32
            $region31: #{tpu_custom_call.1} parent=23 // pred_region
              loop: start=0, step=1, limit=1
              $region33: #{tpu_custom_call.1} parent=31 // loop_pre_header
                _
              $region34: #{tpu_custom_call.1} parent=31 // loop_header
                %s161 = sphi 0, %s165
                %p162 = scmp.ge.s32.totalorder %s161, 1
                %s166 = sphi %s152, %s152
                %s167 = sphi %s144, %s144
              $region35: #{tpu_custom_call.1} parent=31 // loop_header_branch
                %164 = sbr.rel (%p162) target = $region39
              $region36: #{tpu_custom_call.1} parent=31 // loop_body
                %v168 = vld [vmem:[%s166] sm:$0xf]
                %169 = vst [vmem:[%s167] sm:$0xf] %v168
                %v170 = vld [vmem:[%s166 + $0x4] sm:$0xf]
                %171 = vst [vmem:[%s167 + $0x4] sm:$0xf] %v170
                %v172 = vld [vmem:[%s166 + $0x8] sm:$0xf]
                %173 = vst [vmem:[%s167 + $0x8] sm:$0xf] %v172
                %v174 = vld [vmem:[%s166 + $0xc] sm:$0xf]
                %175 = vst [vmem:[%s167 + $0xc] sm:$0xf] %v174
                %v176 = vld [vmem:[%s166 + $0x10] sm:$0xf]
                %177 = vst [vmem:[%s167 + $0x10] sm:$0xf] %v176
                %v178 = vld [vmem:[%s166 + $0x14] sm:$0xf]
                %179 = vst [vmem:[%s167 + $0x14] sm:$0xf] %v178
                %v180 = vld [vmem:[%s166 + $0x18] sm:$0xf]
                %181 = vst [vmem:[%s167 + $0x18] sm:$0xf] %v180
                %v182 = vld [vmem:[%s166 + $0x1c] sm:$0xf]
                %183 = vst [vmem:[%s167 + $0x1c] sm:$0xf] %v182
                %v184 = vld [vmem:[%s166 + $0x20] sm:$0xf]
                %185 = vst [vmem:[%s167 + $0x20] sm:$0xf] %v184
                %v186 = vld [vmem:[%s166 + $0x24] sm:$0xf]
                %187 = vst [vmem:[%s167 + $0x24] sm:$0xf] %v186
                %v188 = vld [vmem:[%s166 + $0x28] sm:$0xf]
                %189 = vst [vmem:[%s167 + $0x28] sm:$0xf] %v188
                %v190 = vld [vmem:[%s166 + $0x2c] sm:$0xf]
                %191 = vst [vmem:[%s167 + $0x2c] sm:$0xf] %v190
                %v192 = vld [vmem:[%s166 + $0x30] sm:$0xf]
                %193 = vst [vmem:[%s167 + $0x30] sm:$0xf] %v192
                %v194 = vld [vmem:[%s166 + $0x34] sm:$0xf]
                %195 = vst [vmem:[%s167 + $0x34] sm:$0xf] %v194
                %v196 = vld [vmem:[%s166 + $0x38] sm:$0xf]
                %197 = vst [vmem:[%s167 + $0x38] sm:$0xf] %v196
                %v198 = vld [vmem:[%s166 + $0x3c] sm:$0xf]
                %199 = vst [vmem:[%s167 + $0x3c] sm:$0xf] %v198
                %v200 = vld [vmem:[%s166 + $0x100] sm:$0xf]
                %201 = vst [vmem:[%s167 + $0x40] sm:$0xf] %v200
                %v202 = vld [vmem:[%s166 + $0x104] sm:$0xf]
                %203 = vst [vmem:[%s167 + $0x44] sm:$0xf] %v202
                %v204 = vld [vmem:[%s166 + $0x108] sm:$0xf]
                %205 = vst [vmem:[%s167 + $0x48] sm:$0xf] %v204
                %v206 = vld [vmem:[%s166 + $0x10c] sm:$0xf]
                %207 = vst [vmem:[%s167 + $0x4c] sm:$0xf] %v206
                %v208 = vld [vmem:[%s166 + $0x110] sm:$0xf]
                %209 = vst [vmem:[%s167 + $0x50] sm:$0xf] %v208
                %v210 = vld [vmem:[%s166 + $0x114] sm:$0xf]
                %211 = vst [vmem:[%s167 + $0x54] sm:$0xf] %v210
                %v212 = vld [vmem:[%s166 + $0x118] sm:$0xf]
                %213 = vst [vmem:[%s167 + $0x58] sm:$0xf] %v212
                %v214 = vld [vmem:[%s166 + $0x11c] sm:$0xf]
                %215 = vst [vmem:[%s167 + $0x5c] sm:$0xf] %v214
                %v216 = vld [vmem:[%s166 + $0x120] sm:$0xf]
                %217 = vst [vmem:[%s167 + $0x60] sm:$0xf] %v216
                %v218 = vld [vmem:[%s166 + $0x124] sm:$0xf]
                %219 = vst [vmem:[%s167 + $0x64] sm:$0xf] %v218
                %v220 = vld [vmem:[%s166 + $0x128] sm:$0xf]
                %221 = vst [vmem:[%s167 + $0x68] sm:$0xf] %v220
                %v222 = vld [vmem:[%s166 + $0x12c] sm:$0xf]
                %223 = vst [vmem:[%s167 + $0x6c] sm:$0xf] %v222
                %v224 = vld [vmem:[%s166 + $0x130] sm:$0xf]
                %225 = vst [vmem:[%s167 + $0x70] sm:$0xf] %v224
                %v226 = vld [vmem:[%s166 + $0x134] sm:$0xf]
                %227 = vst [vmem:[%s167 + $0x74] sm:$0xf] %v226
                %v228 = vld [vmem:[%s166 + $0x138] sm:$0xf]
                %229 = vst [vmem:[%s167 + $0x78] sm:$0xf] %v228
                %v230 = vld [vmem:[%s166 + $0x13c] sm:$0xf]
                %231 = vst [vmem:[%s167 + $0x7c] sm:$0xf] %v230
              $region37: #{tpu_custom_call.1} parent=31 // loop_footer
                %s165 = sadd.s32 1, %s161
              $region38: #{tpu_custom_call.1} parent=31 // loop_footer_branch
                %160 = sbr.rel target = $region34
              $region39: #{tpu_custom_call.1} parent=31 // loop_exit
                _
            $region32: #{tpu_custom_call.1} parent=23 // pred_fallthru
              _
          $region24: #{tpu_custom_call.1} parent=19 // pred_fallthru
            _
          %315 = vnop
        $region20: #{tpu_custom_call.1} parent=15 // pred_fallthru
          _
        // Predicated region
        $region58: #{tpu_custom_call.1} parent=15 // pred_check
          %p316 = pneg %p87
        $region59: #{tpu_custom_call.1} parent=15 // pred_check_branch
          %318 = sbr.rel (%p316) target = $region61
        $region60: #{tpu_custom_call.1} parent=15 // pred_region
          %s319 = sld [smem:[#allocation5]]
          %s320 = ssub.s32 %s319, 1
          %p321 = scmp.lt.s32.totalorder %s19, %s320
          %s322 = scalar_select %p321, %s19, %s320
          %p323 = scmp.lt.s32.totalorder %s322, 3
          %s324 = scalar_select %p323, %s322, 3
          %s325 = scalar_lea.vmem %s2, %s324
          %s326 = sld [smem:[#allocation5]]
          %s327 = ssub.s32 %s326, 1
          %p328 = scmp.lt.s32.totalorder %s19, %s327
          %s329 = scalar_select %p328, %s19, %s327
        $region61: #{tpu_custom_call.1} parent=15 // pred_fallthru
          _
      $region16: #{tpu_custom_call.1} parent=5 // pred_fallthru
        _
      %p330 = scmp.le.s32.totalorder 1, %s11
      %p331 = scmp.lt.s32.totalorder %s11, 5
      %p332 = pnand %p330, %p331
      %p333 = pneg %p332
      // Predicated region
      $region62: #{tpu_custom_call.1} parent=5 // pred_check
        _
      $region63: #{tpu_custom_call.1} parent=5 // pred_check_branch
        %335 = sbr.rel (%p332) target = $region65
      $region64: #{tpu_custom_call.1} parent=5 // pred_region
        %s336 = ssub.s32 %s11, 1
        %s337 = sand.u32 %s46, 1
        %s338 = sand.u32 %s46, 1
        %s339 = smul.addr %s338, 128
        %s340 = scalar_lea.vmem [#allocation6], %s339
        // Predicated region
        $region66: #{tpu_custom_call.1} parent=64 // pred_check
          %p341 = pneg %p59
        $region67: #{tpu_custom_call.1} parent=64 // pred_check_branch
          %343 = sbr.rel (%p341) target = $region69
        $region68: #{tpu_custom_call.1} parent=64 // pred_region
          _
        $region69: #{tpu_custom_call.1} parent=64 // pred_fallthru
          _
        %s344 = sand.u32 %s46, 1
        %s345 = sand.u32 %s46, 1
        %s346 = smul.addr %s345, 128
        %s347 = scalar_lea.vmem [#allocation6], %s346
        %p348 = pneg %p59
        %p349 = pneg %p56
        %s350 = sld [smem:[#allocation5]]
        %s351 = ssub.s32 %s350, 1
        %p352 = scmp.lt.s32.totalorder %s21, %s351
        %s353 = scalar_select %p352, %s21, %s351
        %p354 = scmp.lt.s32.totalorder %s353, 3
        %s355 = scalar_select %p354, %s353, 3
        %s356 = scalar_lea.vmem %s2, %s355
        %p357 = pneg %p93
        %p358 = pneg %p90
        %p359 = pneg %p119
        %p360 = pneg %p116
        %s361 = sld [smem:[#allocation5]]
        %s362 = ssub.s32 %s361, 1
        %p363 = scmp.lt.s32.totalorder %s21, %s362
        %s364 = scalar_select %p363, %s21, %s362
        %s365 = smul.u32 16, %s364
        %s366 = sld [smem:[#allocation5]]
        %s367 = ssub.s32 %s366, 1
        %p368 = scmp.lt.s32.totalorder %s21, %s367
        %s369 = scalar_select %p368, %s21, %s367
        %p370 = scmp.lt.s32.totalorder %s369, 3
        %s371 = scalar_select %p370, %s369, 3
        %s372 = scalar_lea.vmem %s2, %s371
        %s373 = sld [smem:[#allocation5]]
        %s374 = ssub.s32 %s373, 1
        %p375 = scmp.lt.s32.totalorder %s21, %s374
        %s376 = scalar_select %p375, %s21, %s374
        %p378 = scmp.eq.s32.totalorder %s21, 0
        // Predicated region
        $region70: #{tpu_custom_call.1} parent=64 // pred_check
          %p379 = pneg %p378
        $region71: #{tpu_custom_call.1} parent=64 // pred_check_branch
          %381 = sbr.rel (%p379) target = $region73
        $region72: #{tpu_custom_call.1} parent=64 // pred_region
          %vm382 = vcmask 254976
          %383 = vst.msk [vmem:[#allocation2] sm:$0x3] %vm382, 0.0
          %vm384 = vcmask 1024
          %385 = vst.msk [vmem:[#allocation3] sm:$0x3] %vm384, 0.0
        $region73: #{tpu_custom_call.1} parent=64 // pred_fallthru
          _
        %s386 = sld [smem:[#allocation5]]
        %p387 = scmp.lt.s32.totalorder %s21, %s386
        // Predicated region
        $region74: #{tpu_custom_call.1} parent=64 // pred_check
          %p388 = pneg %p387
        $region75: #{tpu_custom_call.1} parent=64 // pred_check_branch
          %390 = sbr.rel (%p388) target = $region77
        $region76: #{tpu_custom_call.1} parent=64 // pred_region
          %v391 = vld [vmem:[%s340] sm:$0xf]
          %v392 = vld [vmem:[%s340 + $0x4] sm:$0xf]
          %v393 = vld [vmem:[%s340 + $0x8] sm:$0xf]
          %v394 = vld [vmem:[%s340 + $0xc] sm:$0xf]
          %v395 = vld [vmem:[%s340 + $0x10] sm:$0xf]
          %v396 = vld [vmem:[%s340 + $0x14] sm:$0xf]
          %v397 = vld [vmem:[%s340 + $0x18] sm:$0xf]
          %v398 = vld [vmem:[%s340 + $0x1c] sm:$0xf]
          %v399 = vld [vmem:[%s340 + $0x20] sm:$0xf]
          %v400 = vld [vmem:[%s340 + $0x24] sm:$0xf]
          %v401 = vld [vmem:[%s340 + $0x28] sm:$0xf]
          %v402 = vld [vmem:[%s340 + $0x2c] sm:$0xf]
          %v403 = vld [vmem:[%s340 + $0x30] sm:$0xf]
          %v404 = vld [vmem:[%s340 + $0x34] sm:$0xf]
          %v405 = vld [vmem:[%s340 + $0x38] sm:$0xf]
          %v406 = vld [vmem:[%s340 + $0x3c] sm:$0xf]
          %v407 = vld [vmem:[%s340 + $0x40] sm:$0xf]
          %v408 = vld [vmem:[%s340 + $0x44] sm:$0xf]
          %v409 = vld [vmem:[%s340 + $0x48] sm:$0xf]
          %v410 = vld [vmem:[%s340 + $0x4c] sm:$0xf]
          %v411 = vld [vmem:[%s340 + $0x50] sm:$0xf]
          %v412 = vld [vmem:[%s340 + $0x54] sm:$0xf]
          %v413 = vld [vmem:[%s340 + $0x58] sm:$0xf]
          %v414 = vld [vmem:[%s340 + $0x5c] sm:$0xf]
          %v415 = vld [vmem:[%s340 + $0x60] sm:$0xf]
          %v416 = vld [vmem:[%s340 + $0x64] sm:$0xf]
          %v417 = vld [vmem:[%s340 + $0x68] sm:$0xf]
          %v418 = vld [vmem:[%s340 + $0x6c] sm:$0xf]
          %v419 = vld [vmem:[%s340 + $0x70] sm:$0xf]
          %v420 = vld [vmem:[%s340 + $0x74] sm:$0xf]
          %v421 = vld [vmem:[%s340 + $0x78] sm:$0xf]
          %v422 = vld [vmem:[%s340 + $0x7c] sm:$0xf]
          %v423 = vld [vmem:[%s372] sm:$0x1]
          %v425 = vunpack.i.l.s16 %v423
          %v426 = vunpack.i.h.s16 %v423
          %v427 = vpack.i.b16 %v425, %v425
          %v428 = vlaneseq
          %v429 = vshrl.u32 %v428, 7
          %v430 = vsub.s32 0, %v429
          %v431 = vrot.slane %v427, %v430
          %v449 = vunpack.c.l.b16 %v391
          %v450 = vunpack.c.l.b16 %v392
          %v451 = vunpack.c.l.b16 %v393
          %v452 = vunpack.c.l.b16 %v394
          %v453 = vunpack.c.l.b16 %v395
          %v454 = vunpack.c.l.b16 %v396
          %v455 = vunpack.c.l.b16 %v397
          %v456 = vunpack.c.l.b16 %v398
          %v457 = vunpack.c.l.b16 %v399
          %v458 = vunpack.c.l.b16 %v400
          %v459 = vunpack.c.l.b16 %v401
          %v460 = vunpack.c.l.b16 %v402
          %v461 = vunpack.c.l.b16 %v403
          %v462 = vunpack.c.l.b16 %v404
          %v463 = vunpack.c.l.b16 %v405
          %v464 = vunpack.c.l.b16 %v406
          %v465 = vpack.c.b16 %v450, %v449
          %v466 = vpack.c.b16 %v452, %v451
          %v467 = vpack.c.b16 %v454, %v453
          %v468 = vpack.c.b16 %v456, %v455
          %v469 = vpack.c.b16 %v458, %v457
          %v470 = vpack.c.b16 %v460, %v459
          %v471 = vpack.c.b16 %v462, %v461
          %v472 = vpack.c.b16 %v464, %v463
          %481 = vmatprep.subr.bf16.mxu0 0
          %482 = vmatpush1.bf16.msra.mxu0 %v465
          %483 = vmatprep.subr.bf16.mxu0 0
          %484 = vmatpush1.bf16.msra.mxu0 %v466
          %485 = vmatprep.subr.bf16.mxu0 0
          %486 = vmatpush1.bf16.msra.mxu0 %v467
          %487 = vmatprep.subr.bf16.mxu0 0
          %488 = vmatpush1.bf16.msra.mxu0 %v468
          %489 = vmatprep.subr.bf16.mxu0 0
          %490 = vmatpush1.bf16.msra.mxu0 %v469
          %491 = vmatprep.subr.bf16.mxu0 0
          %492 = vmatpush1.bf16.msra.mxu0 %v470
          %493 = vmatprep.subr.bf16.mxu0 0
          %494 = vmatpush1.bf16.msra.mxu0 %v471
          %495 = vmatprep.subr.bf16.mxu0 0
          %496 = vmatpush1.bf16.msra.mxu0 %v472
          %497 = vmatprep.subr.bf16.mxu0 0
          %498 = vmatpush1.bf16.msra.mxu0 0
          %499 = vmatprep.subr.bf16.mxu0 0
          %500 = vmatpush1.bf16.msra.mxu0 0
          %501 = vmatprep.subr.bf16.mxu0 0
          %502 = vmatpush1.bf16.msra.mxu0 0
          %503 = vmatprep.subr.bf16.mxu0 0
          %504 = vmatpush1.bf16.msra.mxu0 0
          %505 = vmatprep.subr.bf16.mxu0 0
          %506 = vmatpush1.bf16.msra.mxu0 0
          %507 = vmatprep.subr.bf16.mxu0 0
          %508 = vmatpush1.bf16.msra.mxu0 0
          %509 = vmatprep.subr.bf16.mxu0 0
          %510 = vmatpush1.bf16.msra.mxu0 0
          %511 = vmatprep.subr.bf16.mxu0 0
          %512 = vmatpush1.bf16.msra.mxu0 0
          %513 = vmatprep.mubr.bf16.mxu0 0
          %514 = vmatmul.mubr.bf16.gmra.mrb[0].mxu0 %v431
          %v515 = vpop.f32.mrb[0].mxu0
          %v516 = vadd.f32 0.0, %v515
          %v517 = vpop.f32.mrb[0].mxu0
          %v518 = vpop.f32.mrb[0].mxu0
          %v519 = vpop.f32.mrb[0].mxu0
          %520 = vdwg.mxu0
          %v521 = vpack.i.b16 %v426, %v426
          %v522 = vlaneseq
          %v523 = vshrl.u32 %v522, 7
          %v524 = vsub.s32 0, %v523
          %v525 = vrot.slane %v521, %v524
          %v543 = vunpack.c.l.b16 %v407
          %v544 = vunpack.c.l.b16 %v408
          %v545 = vunpack.c.l.b16 %v409
          %v546 = vunpack.c.l.b16 %v410
          %v547 = vunpack.c.l.b16 %v411
          %v548 = vunpack.c.l.b16 %v412
          %v549 = vunpack.c.l.b16 %v413
          %v550 = vunpack.c.l.b16 %v414
          %v551 = vunpack.c.l.b16 %v415
          %v552 = vunpack.c.l.b16 %v416
          %v553 = vunpack.c.l.b16 %v417
          %v554 = vunpack.c.l.b16 %v418
          %v555 = vunpack.c.l.b16 %v419
          %v556 = vunpack.c.l.b16 %v420
          %v557 = vunpack.c.l.b16 %v421
          %v558 = vunpack.c.l.b16 %v422
          %v559 = vpack.c.b16 %v544, %v543
          %v560 = vpack.c.b16 %v546, %v545
          %v561 = vpack.c.b16 %v548, %v547
          %v562 = vpack.c.b16 %v550, %v549
          %v563 = vpack.c.b16 %v552, %v551
          %v564 = vpack.c.b16 %v554, %v553
          %v565 = vpack.c.b16 %v556, %v555
          %v566 = vpack.c.b16 %v558, %v557
          %575 = vmatprep.subr.bf16.mxu0 0
          %576 = vmatpush1.bf16.msra.mxu0 %v559
          %577 = vmatprep.subr.bf16.mxu0 0
          %578 = vmatpush1.bf16.msra.mxu0 %v560
          %579 = vmatprep.subr.bf16.mxu0 0
          %580 = vmatpush1.bf16.msra.mxu0 %v561
          %581 = vmatprep.subr.bf16.mxu0 0
          %582 = vmatpush1.bf16.msra.mxu0 %v562
          %583 = vmatprep.subr.bf16.mxu0 0
          %584 = vmatpush1.bf16.msra.mxu0 %v563
          %585 = vmatprep.subr.bf16.mxu0 0
          %586 = vmatpush1.bf16.msra.mxu0 %v564
          %587 = vmatprep.subr.bf16.mxu0 0
          %588 = vmatpush1.bf16.msra.mxu0 %v565
          %589 = vmatprep.subr.bf16.mxu0 0
          %590 = vmatpush1.bf16.msra.mxu0 %v566
          %591 = vmatprep.subr.bf16.mxu0 0
          %592 = vmatpush1.bf16.msra.mxu0 0
          %593 = vmatprep.subr.bf16.mxu0 0
          %594 = vmatpush1.bf16.msra.mxu0 0
          %595 = vmatprep.subr.bf16.mxu0 0
          %596 = vmatpush1.bf16.msra.mxu0 0
          %597 = vmatprep.subr.bf16.mxu0 0
          %598 = vmatpush1.bf16.msra.mxu0 0
          %599 = vmatprep.subr.bf16.mxu0 0
          %600 = vmatpush1.bf16.msra.mxu0 0
          %601 = vmatprep.subr.bf16.mxu0 0
          %602 = vmatpush1.bf16.msra.mxu0 0
          %603 = vmatprep.subr.bf16.mxu0 0
          %604 = vmatpush1.bf16.msra.mxu0 0
          %605 = vmatprep.subr.bf16.mxu0 0
          %606 = vmatpush1.bf16.msra.mxu0 0
          %607 = vmatprep.mubr.bf16.mxu0 0
          %608 = vmatmul.mubr.bf16.gmra.mrb[0].mxu0 %v525
          %v609 = vpop.f32.mrb[0].mxu0
          %v610 = vadd.f32 0.0, %v609
          %v611 = vpop.f32.mrb[0].mxu0
          %v612 = vpop.f32.mrb[0].mxu0
          %v613 = vpop.f32.mrb[0].mxu0
          %614 = vdwg.mxu0
          %v615 = vld [vmem:[#allocation2] sm:$0x3]
          %v618 = vrot.slane %v610, 7
          %vm619 = vcmask 1041409
          %v620 = vsel %vm619, %v618, %v516
          %v622 = vadd.f32 %v615, %v620
          %vm623 = vcmask 254976
          %624 = vst.msk [vmem:[#allocation2] sm:$0x3] %vm623, %v622
          %v625 = vld [vmem:[#allocation3] sm:$0x3]
          %v626 = vunpack.c.l.bf16 %v423
          %vm627 = vcmask 1041408
          %v628 = vsel %vm627, %v626, 0.0
          %629 = vadd.xlane.f32.xlu0 %v628
          %v630 = vpop.xlane.xlu0 %629
          %v631 = vadd.f32 %v625, %v630
          %vm632 = vcmask 1024
          %633 = vst.msk [vmem:[#allocation3] sm:$0x3] %vm632, %v631
        $region77: #{tpu_custom_call.1} parent=64 // pred_fallthru
          _
        %p634 = scmp.eq.s32.totalorder %s21, 3
        // Predicated region
        $region78: #{tpu_custom_call.1} parent=64 // pred_check
          %p635 = pneg %p634
        $region79: #{tpu_custom_call.1} parent=64 // pred_check_branch
          %637 = sbr.rel (%p635) target = $region81
        $region80: #{tpu_custom_call.1} parent=64 // pred_region
          %v638 = vld [vmem:[#allocation3] sm:$0x3]
          %v639 = vmax.f32 %v638, 1e-09
          %v640 = vld [vmem:[#allocation2] sm:$0x3]
          %642 = vset.pattern.permute.xlu0 0
          %643 = vperm.xlu0 %642, %v639
          %v644 = vpop.permute.xlu0 %643
          %v646 = vrcp.pop %v644
          %v647 = vmul.f32 %v640, %v646
          %vm648 = vcmask 254976
          %649 = vst.msk [vmem:[#allocation7] sm:$0x3] %vm648, %v647
        $region81: #{tpu_custom_call.1} parent=64 // pred_fallthru
          _
        // Predicated region
        $region82: #{tpu_custom_call.1} parent=64 // pred_check
          %p650 = pneg %p116
        $region83: #{tpu_custom_call.1} parent=64 // pred_check_branch
          %652 = sbr.rel (%p650) target = $region85
        $region84: #{tpu_custom_call.1} parent=64 // pred_region
          %s654 = ssub.s32 32, 32
          %655 = vsyncadd [#allocation8], %s654
          %s656 = smul.addr %s20, 32
          %s657 = scalar_lea.hbm %s3, %s656
          %s659 = sshll.u32 [#allocation7], 4
          %s660 = int_to_ptr.vmem [resolvable:$true] %s659
          %662 = dma.vmem_to_hbm [thread:$0]  %s660, 32, %s657, [#allocation8]
        $region85: #{tpu_custom_call.1} parent=64 // pred_fallthru
          _
        // Predicated region
        $region86: #{tpu_custom_call.1} parent=64 // pred_check
          %p663 = pneg %p116
        $region87: #{tpu_custom_call.1} parent=64 // pred_check_branch
          %665 = sbr.rel (%p663) target = $region89
        $region88: #{tpu_custom_call.1} parent=64 // pred_region
          %666 = dma.done [#allocation8], 32
        $region89: #{tpu_custom_call.1} parent=64 // pred_fallthru
          _
      $region65: #{tpu_custom_call.1} parent=5 // pred_fallthru
        _
      %p667 = scmp.le.s32.totalorder 2, %s11
      // Predicated region
      $region90: #{tpu_custom_call.1} parent=5 // pred_check
        %p668 = pneg %p667
      $region91: #{tpu_custom_call.1} parent=5 // pred_check_branch
        %670 = sbr.rel (%p668) target = $region93
      $region92: #{tpu_custom_call.1} parent=5 // pred_region
        %s671 = ssub.s32 %s11, 2
      $region93: #{tpu_custom_call.1} parent=5 // pred_fallthru
        _
    $region6: #{tpu_custom_call.1} parent=1 // loop_footer
      %s15 = sadd.s32 1, %s11
    $region7: #{tpu_custom_call.1} parent=1 // loop_footer_branch
      %10 = sbr.rel target = $region3
    $region8: #{tpu_custom_call.1} parent=1 // loop_exit
      _
    %672 = vsyncpa [#allocation8], 1
    %s673 = scalar_lea.sflag [#allocation8], 1
    %674 = vsyncpa %s673, 1

</llo_original>
